<compile_context>
chip_gen: v5e
topology: v5e:2x2
jax: 0.10.0
libtpu: 0.0.40
codegen_flags: <defaults>
</compile_context>

<pallas_src>
import numpy as np
import jax
import jax.numpy as jnp
from jax.experimental import pallas as pl

EMBED = 32
HEADS = 4
GROUPS = 2
HEAD_DIM = EMBED // HEADS
EPS = 1e-6
OUT_LANES = 128            # lane-dense output slab width


def _rope_tables(n, head_dim, heads):
    """cos/sin tables tiled per head (N, E) plus the block-diagonal rotate_half matrix."""
    pos = np.arange(n, dtype=np.float32)
    inv_freq = 1.0 / (10000.0 ** (np.arange(0, head_dim, 2, dtype=np.float32) / head_dim))
    freqs = pos[:, None] * inv_freq[None, :]              # (N, D/2)
    emb = np.concatenate([freqs, freqs], axis=-1)         # (N, D)
    cos_t = np.tile(np.cos(emb), (1, heads))              # (N, E)
    sin_t = np.tile(np.sin(emb), (1, heads))
    half = head_dim // 2
    rh = np.zeros((head_dim, head_dim), dtype=np.float32)
    for j in range(half):
        rh[j + half, j] = -1.0                            # out[:, j]      = -x[:, j+half]
        rh[j, j + half] = 1.0                             # out[:, j+half] =  x[:, j]
    R = np.kron(np.eye(heads, dtype=np.float32), rh)      # (E, E) block-diag rotate_half
    return jnp.asarray(cos_t), jnp.asarray(sin_t), jnp.asarray(R)


def _expand_group_weights(w, b, heads, groups, head_dim):
    """Fold the GQA group->head repetition (repeat_interleave of KV groups) into the
    projection weights so the kernel works with full E-wide K/V tensors."""
    rep = heads // groups
    e_in = w.shape[0]
    w_exp = jnp.repeat(w.reshape(e_in, groups, head_dim), rep, axis=1).reshape(e_in, heads * head_dim)
    b_exp = jnp.repeat(b.reshape(1, groups, head_dim), rep, axis=1).reshape(1, heads * head_dim)
    return w_exp, b_exp


def make_params(key, embed=EMBED, groups=GROUPS, head_dim=HEAD_DIM):
    ks = jax.random.split(key, 10)
    s = 0.05
    kv_dim = groups * head_dim
    return dict(
        wq=jax.random.normal(ks[0], (embed, embed), jnp.float32) * s,
        bq=jax.random.normal(ks[1], (1, embed), jnp.float32) * s,
        wk=jax.random.normal(ks[2], (embed, kv_dim), jnp.float32) * s,
        bk=jax.random.normal(ks[3], (1, kv_dim), jnp.float32) * s,
        wv=jax.random.normal(ks[4], (embed, kv_dim), jnp.float32) * s,
        bv=jax.random.normal(ks[5], (1, kv_dim), jnp.float32) * s,
        wo=jax.random.normal(ks[6], (embed, embed), jnp.float32) * s,
        bo=jax.random.normal(ks[7], (1, embed), jnp.float32) * s,
        g1=jnp.ones((1, embed), jnp.float32),                               # RMSNorm 1 weight
        wg=jax.random.normal(ks[8], (embed, 2 * embed), jnp.float32) * s,   # GeGLU proj
        bg=jax.random.normal(ks[9], (1, 2 * embed), jnp.float32) * s,
        g2=jnp.ones((1, embed), jnp.float32),                               # RMSNorm 2 weight
    )


def transformer_block_forward(x, params):
    B, N, E = x.shape
    assert E == EMBED
    BN = B * N
    H, D = HEADS, HEAD_DIM
    HBN = H * BN
    scale = 1.0 / (D ** 0.5)

    cos_t, sin_t, rot = _rope_tables(N, D, H)
    cos_full = jnp.tile(cos_t, (B, 1))                     # (BN, E): pre-tiled over batch
    sin_full = jnp.tile(sin_t, (B, 1))

    # per-head lane masks, stacked head-major over the BN rows (for the stacked attention)
    head_mask = (np.arange(E)[None, :] // D == np.arange(H)[:, None]).astype(np.float32)   # (H, E)
    mask_big = jnp.asarray(np.repeat(head_mask, BN, axis=0))                               # (HBN, E)

    # cross-batch additive score bias, tiled over heads (exact: exp underflows to 0)
    row_batch = np.arange(BN) // N
    bias = np.where(row_batch[:, None] == row_batch[None, :], 0.0, -1e30).astype(np.float32)  # (BN, BN)
    bias_big = jnp.asarray(np.tile(bias, (H, 1)))                                             # (HBN, BN)

    # GQA group->head expansion folded into K/V weights; score scale folded into Wq/bq
    wk_exp, bk_exp = _expand_group_weights(params["wk"], params["bk"], H, GROUPS, D)
    wv_exp, bv_exp = _expand_group_weights(params["wv"], params["bv"], H, GROUPS, D)
    w_qk = jnp.concatenate([params["wq"] * scale, wk_exp], axis=1)        # (E, 2E)
    b_qk = jnp.concatenate([params["bq"] * scale, bk_exp], axis=1)        # (1, 2E)

    # ---- packed constant slabs (every piece starts on an 8-sublane boundary) ----
    # 32-lane slab rows:
    R_ROT, R_WV, R_WO = 0, 32, 64
    R_COS, R_SIN = 96, 112
    R_MASK = 128
    R_BV, R_BO, R_G1, R_G2 = 192, 208, 224, 240
    c32 = jnp.concatenate([
        rot,                                   # 0:32
        wv_exp,                                # 32:64
        params["wo"],                          # 64:96
        cos_full,                              # 96:112
        sin_full,                              # 112:128
        mask_big,                              # 128:192
        jnp.tile(bv_exp, (BN, 1)),             # 192:208
        jnp.tile(params["bo"], (BN, 1)),       # 208:224
        jnp.tile(params["g1"], (BN, 1)),       # 224:240
        jnp.tile(params["g2"], (BN, 1)),       # 240:256
    ], axis=0)                                 # (256, E)

    # 64-lane slab rows:
    R64_WQK, R64_WG, R64_BQK, R64_BG = 0, 32, 64, 80
    c64 = jnp.concatenate([
        w_qk,                                  # 0:32
        params["wg"],                          # 32:64
        jnp.tile(b_qk, (BN, 1)),               # 64:80
        jnp.tile(params["bg"], (BN, 1)),       # 80:96
    ], axis=0)                                 # (96, 2E)

    def kernel(x_ref, c32_ref, c64_ref, bias_ref, out_ref):
        xx = x_ref[...]                                            # (BN, E)

        # --- rotary embedding on the pre-projection q == k == x (rotate_half folded into rot) ---
        # TODO(synk): the img_pos/end_img_pos 2-D rotary branch and the KV-cache concat are
        # data-dependent (python-list driven) in the reference and are not exercised here
        # (forward reproduced for cache=None, img_pos=[]).
        rot_m = c32_ref[R_ROT:R_ROT + E, :]
        x_rot = jnp.dot(xx, rot_m, preferred_element_type=jnp.float32)
        k_rope = xx * c32_ref[R_COS:R_COS + BN, :] + x_rot * c32_ref[R_SIN:R_SIN + BN, :]

        # --- fused, pre-scaled Q|K projection + V projection (weights already head-expanded) ---
        qk = jnp.dot(k_rope, c64_ref[R64_WQK:R64_WQK + E, :],
                     preferred_element_type=jnp.float32) + c64_ref[R64_BQK:R64_BQK + BN, :]
        qp = qk[:, :E]                                             # (BN, E), scale folded in
        kp = qk[:, E:]                                             # (BN, E)
        vp = jnp.dot(xx, c32_ref[R_WV:R_WV + E, :],
                     preferred_element_type=jnp.float32) + c32_ref[R_BV:R_BV + BN, :]

        # --- all-head attention in one pass: stack masked per-head queries along sublanes ---
        mbig = c32_ref[R_MASK:R_MASK + HBN, :]                     # (HBN, E)
        q_big = jnp.concatenate([qp] * H, axis=0)                  # (HBN, E)
        qs = q_big * mbig                                          # head h rows keep head-h lanes
        s = jax.lax.dot_general(qs, kp, (((1,), (1,)), ((), ())),
                                preferred_element_type=jnp.float32)            # (HBN, BN)
        # TODO(synk): no causal/padding mask — matches the unmasked reference attention.
        s = s + bias_ref[...]                                      # cross-batch -1e30 bias
        s = s - jnp.max(s, axis=-1, keepdims=True)
        p = jnp.exp(s)
        a = p * pl.reciprocal(jnp.sum(p, axis=-1, keepdims=True), approx=True)
        ctx_all = jnp.dot(a, vp, preferred_element_type=jnp.float32) * mbig    # (HBN, E)
        ctx = (ctx_all[0:BN] + ctx_all[BN:2 * BN]                  # masked blocks -> plain adds
               + ctx_all[2 * BN:3 * BN] + ctx_all[3 * BN:4 * BN])  # (BN, E)

        attn_out = jnp.dot(ctx, c32_ref[R_WO:R_WO + E, :],
                           preferred_element_type=jnp.float32) + c32_ref[R_BO:R_BO + BN, :]

        # --- residual + RMSNorm 1 ---
        h1 = xx + attn_out
        h1 = h1 * jax.lax.rsqrt(jnp.mean(h1 * h1, axis=-1, keepdims=True) + EPS) \
                * c32_ref[R_G1:R_G1 + BN, :]

        # --- GeGLU feed-forward ---
        u = jnp.dot(h1, c64_ref[R64_WG:R64_WG + E, :],
                    preferred_element_type=jnp.float32) + c64_ref[R64_BG:R64_BG + BN, :]
        # TODO(synk): tanh-approx GELU kept (GeGLU body not shown in the spec); PyTorch
        # nn.GELU() default is the exact erf form — flip approximate=False if that is meant.
        fc = u[:, :E] * jax.nn.gelu(u[:, E:], approximate=True)

        # --- residual + RMSNorm 2 ---
        y = h1 + fc
        y = y * jax.lax.rsqrt(jnp.mean(y * y, axis=-1, keepdims=True) + EPS) \
              * c32_ref[R_G2:R_G2 + BN, :]

        # --- single lane-dense 128-wide output slab: [ y | k_cache | zero pad ] ---
        pad = jnp.zeros((BN, OUT_LANES - 2 * E), jnp.float32)
        out_ref[...] = jnp.concatenate([y, k_rope, pad], axis=-1)

    full = lambda i: (0, 0)
    in_specs = [
        pl.BlockSpec((BN, E), full),          # x (flattened)
        pl.BlockSpec((256, E), full),         # packed 32-lane constant slab
        pl.BlockSpec((96, 2 * E), full),      # packed 64-lane constant slab
        pl.BlockSpec((HBN, BN), full),        # cross-batch score bias (tiled over heads)
    ]

    out = pl.pallas_call(
        kernel,
        grid=(1,),                            # whole problem in one invocation
        in_specs=in_specs,
        out_specs=pl.BlockSpec((BN, OUT_LANES), full),
        out_shape=jax.ShapeDtypeStruct((BN, OUT_LANES), jnp.float32),
    )(x.reshape(BN, E), c32, c64, bias_big)

    y = out[:, :E].reshape(B, N, E)
    k_cache = out[:, E:2 * E].reshape(B, N, E)   # rotated pre-projection k
    v_cache = x                                  # raw input is the v cache; no kernel DMA needed
    return y, (k_cache, v_cache)


if __name__ == "__main__":
    key = jax.random.PRNGKey(0)
    kx, kp = jax.random.split(key)
    B, N = 2, 8
    x = jax.random.normal(kx, (B, N, EMBED), jnp.float32)
    params = make_params(kp)
    y, (k_cache, v_cache) = transformer_block_forward(x, params)
    jax.block_until_ready((y, k_cache, v_cache))
    assert y.shape == (B, N, EMBED)
    assert k_cache.shape == (B, N, EMBED) and v_cache.shape == (B, N, EMBED)
    assert bool(jnp.all(jnp.isfinite(y))) and bool(jnp.all(jnp.isfinite(k_cache)))
    print("KERNEL_OK")
</pallas_src>

<mosaic_0001>
module attributes {stable_mosaic.version = 11 : i64} {
  func.func @kernel(%arg0: i32, %arg1: memref<16x32xf32, #tpu.memory_space<vmem>>, %arg2: memref<256x32xf32, #tpu.memory_space<vmem>>, %arg3: memref<96x64xf32, #tpu.memory_space<vmem>>, %arg4: memref<64x16xf32, #tpu.memory_space<vmem>>, %arg5: memref<16x128xf32, #tpu.memory_space<vmem>>) attributes {dimension_semantics = [#tpu.dimension_semantics<arbitrary>], iteration_bounds = array<i64: 1>, scalar_prefetch = 0 : i64, scratch_operands = 0 : i64, tpu.core_type = #tpu.core_type<tc>, window_params = [{pipeline_mode = #tpu.pipeline_mode<synchronous>, transform_indices = @transform_0, window_bounds = array<i64: 16, 32>}, {pipeline_mode = #tpu.pipeline_mode<synchronous>, transform_indices = @transform_1, window_bounds = array<i64: 256, 32>}, {pipeline_mode = #tpu.pipeline_mode<synchronous>, transform_indices = @transform_2, window_bounds = array<i64: 96, 64>}, {pipeline_mode = #tpu.pipeline_mode<synchronous>, transform_indices = @transform_3, window_bounds = array<i64: 64, 16>}, {pipeline_mode = #tpu.pipeline_mode<synchronous>, transform_indices = @transform_4, window_bounds = array<i64: 16, 128>}]} {
    %c0 = arith.constant 0 : index
    %c0_0 = arith.constant 0 : index
    %0 = vector.load %arg1[%c0, %c0_0] : memref<16x32xf32, #tpu.memory_space<vmem>>, vector<16x32xf32>
    %c0_1 = arith.constant 0 : index
    %c0_2 = arith.constant 0 : index
    %1 = vector.load %arg2[%c0_1, %c0_2] : memref<256x32xf32, #tpu.memory_space<vmem>>, vector<32x32xf32>
    %cst = arith.constant dense<0.000000e+00> : vector<16x32xf32>
    %2 = tpu.matmul %0, %1, %cst {dimension_numbers = #tpu.dot_dimension_numbers<[1], [0], [0], [1], [0, 0, 1, 1], [], []>} : vector<16x32xf32>, vector<32x32xf32>, vector<16x32xf32> -> vector<16x32xf32>
    %c96 = arith.constant 96 : index
    %c0_3 = arith.constant 0 : index
    %3 = vector.load %arg2[%c96, %c0_3] : memref<256x32xf32, #tpu.memory_space<vmem>>, vector<16x32xf32>
    %4 = arith.mulf %0, %3 : vector<16x32xf32>
    %c112 = arith.constant 112 : index
    %c0_4 = arith.constant 0 : index
    %5 = vector.load %arg2[%c112, %c0_4] : memref<256x32xf32, #tpu.memory_space<vmem>>, vector<16x32xf32>
    %6 = arith.mulf %2, %5 : vector<16x32xf32>
    %7 = arith.addf %4, %6 : vector<16x32xf32>
    %c0_5 = arith.constant 0 : index
    %c0_6 = arith.constant 0 : index
    %8 = vector.load %arg3[%c0_5, %c0_6] : memref<96x64xf32, #tpu.memory_space<vmem>>, vector<32x64xf32>
    %cst_7 = arith.constant dense<0.000000e+00> : vector<16x64xf32>
    %9 = tpu.matmul %7, %8, %cst_7 {dimension_numbers = #tpu.dot_dimension_numbers<[1], [0], [0], [1], [0, 0, 1, 1], [], []>} : vector<16x32xf32>, vector<32x64xf32>, vector<16x64xf32> -> vector<16x64xf32>
    %c64 = arith.constant 64 : index
    %c0_8 = arith.constant 0 : index
    %10 = vector.load %arg3[%c64, %c0_8] : memref<96x64xf32, #tpu.memory_space<vmem>>, vector<16x64xf32>
    %11 = arith.addf %9, %10 : vector<16x64xf32>
    %12 = vector.extract_strided_slice %11 {offsets = [0, 0], sizes = [16, 32], strides = [1, 1]} : vector<16x64xf32> to vector<16x32xf32>
    %13 = vector.extract_strided_slice %11 {offsets = [0, 32], sizes = [16, 32], strides = [1, 1]} : vector<16x64xf32> to vector<16x32xf32>
    %c32 = arith.constant 32 : index
    %c0_9 = arith.constant 0 : index
    %14 = vector.load %arg2[%c32, %c0_9] : memref<256x32xf32, #tpu.memory_space<vmem>>, vector<32x32xf32>
    %cst_10 = arith.constant dense<0.000000e+00> : vector<16x32xf32>
    %15 = tpu.matmul %0, %14, %cst_10 {dimension_numbers = #tpu.dot_dimension_numbers<[1], [0], [0], [1], [0, 0, 1, 1], [], []>} : vector<16x32xf32>, vector<32x32xf32>, vector<16x32xf32> -> vector<16x32xf32>
    %c192 = arith.constant 192 : index
    %c0_11 = arith.constant 0 : index
    %16 = vector.load %arg2[%c192, %c0_11] : memref<256x32xf32, #tpu.memory_space<vmem>>, vector<16x32xf32>
    %17 = arith.addf %15, %16 : vector<16x32xf32>
    %c128 = arith.constant 128 : index
    %c0_12 = arith.constant 0 : index
    %18 = vector.load %arg2[%c128, %c0_12] : memref<256x32xf32, #tpu.memory_space<vmem>>, vector<64x32xf32>
    %19 = tpu.concatenate %12, %12, %12, %12 in 0 : vector<16x32xf32>, vector<16x32xf32>, vector<16x32xf32>, vector<16x32xf32> -> vector<64x32xf32>
    %20 = arith.mulf %19, %18 : vector<64x32xf32>
    %cst_13 = arith.constant dense<0.000000e+00> : vector<64x16xf32>
    %21 = tpu.matmul %20, %13, %cst_13 {dimension_numbers = #tpu.dot_dimension_numbers<[1], [1], [0], [0], [0, 0, 1, 0], [], []>} : vector<64x32xf32>, vector<16x32xf32>, vector<64x16xf32> -> vector<64x16xf32>
    %c0_14 = arith.constant 0 : index
    %c0_15 = arith.constant 0 : index
    %22 = vector.load %arg4[%c0_14, %c0_15] : memref<64x16xf32, #tpu.memory_space<vmem>>, vector<64x16xf32>
    %23 = arith.addf %21, %22 : vector<64x16xf32>
    %cst_16 = arith.constant dense<0xFF800000> : vector<64xf32>
    %24 = vector.multi_reduction <maximumf>, %23, %cst_16 [1] : vector<64x16xf32> to vector<64xf32>
    %25 = vector.shape_cast %24 : vector<64xf32> to vector<64x1xf32>
    %26 = vector.broadcast %25 : vector<64x1xf32> to vector<64x16xf32>
    %27 = arith.subf %23, %26 : vector<64x16xf32>
    %28 = math.exp %27 : vector<64x16xf32>
    %cst_17 = arith.constant dense<0.000000e+00> : vector<64xf32>
    %29 = vector.multi_reduction <add>, %28, %cst_17 [1] : vector<64x16xf32> to vector<64xf32>
    %30 = vector.shape_cast %29 : vector<64xf32> to vector<64x1xf32>
    %31 = tpu.reciprocal %30 {approx = true} : vector<64x1xf32> -> vector<64x1xf32>
    %32 = vector.broadcast %31 : vector<64x1xf32> to vector<64x16xf32>
    %33 = arith.mulf %28, %32 : vector<64x16xf32>
    %cst_18 = arith.constant dense<0.000000e+00> : vector<64x32xf32>
    %34 = tpu.matmul %33, %17, %cst_18 {dimension_numbers = #tpu.dot_dimension_numbers<[1], [0], [0], [1], [0, 0, 1, 1], [], []>} : vector<64x16xf32>, vector<16x32xf32>, vector<64x32xf32> -> vector<64x32xf32>
    %35 = arith.mulf %34, %18 : vector<64x32xf32>
    %36 = vector.extract_strided_slice %35 {offsets = [0, 0], sizes = [16, 32], strides = [1, 1]} : vector<64x32xf32> to vector<16x32xf32>
    %37 = vector.extract_strided_slice %35 {offsets = [16, 0], sizes = [16, 32], strides = [1, 1]} : vector<64x32xf32> to vector<16x32xf32>
    %38 = arith.addf %36, %37 : vector<16x32xf32>
    %39 = vector.extract_strided_slice %35 {offsets = [32, 0], sizes = [16, 32], strides = [1, 1]} : vector<64x32xf32> to vector<16x32xf32>
    %40 = arith.addf %38, %39 : vector<16x32xf32>
    %41 = vector.extract_strided_slice %35 {offsets = [48, 0], sizes = [16, 32], strides = [1, 1]} : vector<64x32xf32> to vector<16x32xf32>
    %42 = arith.addf %40, %41 : vector<16x32xf32>
    %c64_19 = arith.constant 64 : index
    %c0_20 = arith.constant 0 : index
    %43 = vector.load %arg2[%c64_19, %c0_20] : memref<256x32xf32, #tpu.memory_space<vmem>>, vector<32x32xf32>
    %cst_21 = arith.constant dense<0.000000e+00> : vector<16x32xf32>
    %44 = tpu.matmul %42, %43, %cst_21 {dimension_numbers = #tpu.dot_dimension_numbers<[1], [0], [0], [1], [0, 0, 1, 1], [], []>} : vector<16x32xf32>, vector<32x32xf32>, vector<16x32xf32> -> vector<16x32xf32>
    %c208 = arith.constant 208 : index
    %c0_22 = arith.constant 0 : index
    %45 = vector.load %arg2[%c208, %c0_22] : memref<256x32xf32, #tpu.memory_space<vmem>>, vector<16x32xf32>
    %46 = arith.addf %44, %45 : vector<16x32xf32>
    %47 = arith.addf %0, %46 : vector<16x32xf32>
    %48 = arith.mulf %47, %47 : vector<16x32xf32>
    %cst_23 = arith.constant dense<0.000000e+00> : vector<16xf32>
    %49 = vector.multi_reduction <add>, %48, %cst_23 [1] : vector<16x32xf32> to vector<16xf32>
    %50 = vector.shape_cast %49 : vector<16xf32> to vector<16x1xf32>
    %cst_24 = arith.constant 3.200000e+01 : f32
    %51 = vector.broadcast %cst_24 : f32 to vector<16x1xf32>
    %52 = arith.divf %50, %51 : vector<16x1xf32>
    %cst_25 = arith.constant 9.99999997E-7 : f32
    %53 = vector.broadcast %cst_25 : f32 to vector<16x1xf32>
    %54 = arith.addf %52, %53 : vector<16x1xf32>
    %55 = math.rsqrt %54 : vector<16x1xf32>
    %56 = vector.broadcast %55 : vector<16x1xf32> to vector<16x32xf32>
    %57 = arith.mulf %47, %56 : vector<16x32xf32>
    %c224 = arith.constant 224 : index
    %c0_26 = arith.constant 0 : index
    %58 = vector.load %arg2[%c224, %c0_26] : memref<256x32xf32, #tpu.memory_space<vmem>>, vector<16x32xf32>
    %59 = arith.mulf %57, %58 : vector<16x32xf32>
    %c32_27 = arith.constant 32 : index
    %c0_28 = arith.constant 0 : index
    %60 = vector.load %arg3[%c32_27, %c0_28] : memref<96x64xf32, #tpu.memory_space<vmem>>, vector<32x64xf32>
    %cst_29 = arith.constant dense<0.000000e+00> : vector<16x64xf32>
    %61 = tpu.matmul %59, %60, %cst_29 {dimension_numbers = #tpu.dot_dimension_numbers<[1], [0], [0], [1], [0, 0, 1, 1], [], []>} : vector<16x32xf32>, vector<32x64xf32>, vector<16x64xf32> -> vector<16x64xf32>
    %c80 = arith.constant 80 : index
    %c0_30 = arith.constant 0 : index
    %62 = vector.load %arg3[%c80, %c0_30] : memref<96x64xf32, #tpu.memory_space<vmem>>, vector<16x64xf32>
    %63 = arith.addf %61, %62 : vector<16x64xf32>
    %64 = vector.extract_strided_slice %63 {offsets = [0, 0], sizes = [16, 32], strides = [1, 1]} : vector<16x64xf32> to vector<16x32xf32>
    %65 = vector.extract_strided_slice %63 {offsets = [0, 32], sizes = [16, 32], strides = [1, 1]} : vector<16x64xf32> to vector<16x32xf32>
    %66 = arith.mulf %65, %65 : vector<16x32xf32>
    %67 = arith.mulf %65, %66 : vector<16x32xf32>
    %cst_31 = arith.constant 4.471500e-02 : f32
    %68 = vector.broadcast %cst_31 : f32 to vector<16x32xf32>
    %69 = arith.mulf %68, %67 : vector<16x32xf32>
    %70 = arith.addf %65, %69 : vector<16x32xf32>
    %cst_32 = arith.constant 0.797884583 : f32
    %71 = vector.broadcast %cst_32 : f32 to vector<16x32xf32>
    %72 = arith.mulf %71, %70 : vector<16x32xf32>
    %73 = math.tanh %72 : vector<16x32xf32>
    %cst_33 = arith.constant 1.000000e+00 : f32
    %74 = vector.broadcast %cst_33 : f32 to vector<16x32xf32>
    %75 = arith.addf %74, %73 : vector<16x32xf32>
    %cst_34 = arith.constant 5.000000e-01 : f32
    %76 = vector.broadcast %cst_34 : f32 to vector<16x32xf32>
    %77 = arith.mulf %76, %75 : vector<16x32xf32>
    %78 = arith.mulf %65, %77 : vector<16x32xf32>
    %79 = arith.mulf %64, %78 : vector<16x32xf32>
    %80 = arith.addf %59, %79 : vector<16x32xf32>
    %81 = arith.mulf %80, %80 : vector<16x32xf32>
    %cst_35 = arith.constant dense<0.000000e+00> : vector<16xf32>
    %82 = vector.multi_reduction <add>, %81, %cst_35 [1] : vector<16x32xf32> to vector<16xf32>
    %83 = vector.shape_cast %82 : vector<16xf32> to vector<16x1xf32>
    %cst_36 = arith.constant 3.200000e+01 : f32
    %84 = vector.broadcast %cst_36 : f32 to vector<16x1xf32>
    %85 = arith.divf %83, %84 : vector<16x1xf32>
    %cst_37 = arith.constant 9.99999997E-7 : f32
    %86 = vector.broadcast %cst_37 : f32 to vector<16x1xf32>
    %87 = arith.addf %85, %86 : vector<16x1xf32>
    %88 = math.rsqrt %87 : vector<16x1xf32>
    %89 = vector.broadcast %88 : vector<16x1xf32> to vector<16x32xf32>
    %90 = arith.mulf %80, %89 : vector<16x32xf32>
    %c240 = arith.constant 240 : index
    %c0_38 = arith.constant 0 : index
    %91 = vector.load %arg2[%c240, %c0_38] : memref<256x32xf32, #tpu.memory_space<vmem>>, vector<16x32xf32>
    %92 = arith.mulf %90, %91 : vector<16x32xf32>
    %cst_39 = arith.constant 0.000000e+00 : f32
    %93 = vector.broadcast %cst_39 : f32 to vector<16x64xf32>
    %94 = tpu.concatenate %92, %7, %93 in 1 : vector<16x32xf32>, vector<16x32xf32>, vector<16x64xf32> -> vector<16x128xf32>
    %c0_40 = arith.constant 0 : index
    %c0_41 = arith.constant 0 : index
    %95 = vector.load %arg5[%c0_40, %c0_41] : memref<16x128xf32, #tpu.memory_space<vmem>>, vector<16x128xf32>
    tpu.vector_store %arg5[%c0_40, %c0_41], %94 {strides = array<i32>} : memref<16x128xf32, #tpu.memory_space<vmem>>, vector<16x128xf32>,
    return
  }
  func.func @transform_0(%arg0: i32) -> (i32, i32) {
    %c0_i32 = arith.constant 0 : i32
    %c0_i32_0 = arith.constant 0 : i32
    %c0_i32_1 = arith.constant 0 : i32
    return %c0_i32, %c0_i32_0 : i32, i32
  }
  func.func @transform_1(%arg0: i32) -> (i32, i32) {
    %c0_i32 = arith.constant 0 : i32
    %c0_i32_0 = arith.constant 0 : i32
    %c0_i32_1 = arith.constant 0 : i32
    return %c0_i32, %c0_i32_0 : i32, i32
  }
  func.func @transform_2(%arg0: i32) -> (i32, i32) {
    %c0_i32 = arith.constant 0 : i32
    %c0_i32_0 = arith.constant 0 : i32
    %c0_i32_1 = arith.constant 0 : i32
    return %c0_i32, %c0_i32_0 : i32, i32
  }
  func.func @transform_3(%arg0: i32) -> (i32, i32) {
    %c0_i32 = arith.constant 0 : i32
    %c0_i32_0 = arith.constant 0 : i32
    %c0_i32_1 = arith.constant 0 : i32
    return %c0_i32, %c0_i32_0 : i32, i32
  }
  func.func @transform_4(%arg0: i32) -> (i32, i32) {
    %c0_i32 = arith.constant 0 : i32
    %c0_i32_0 = arith.constant 0 : i32
    %c0_i32_1 = arith.constant 0 : i32
    return %c0_i32, %c0_i32_0 : i32, i32
  }
}

</mosaic_0001>

<llo_original>
// kernel: tpu_custom_call.1
$region0: #{tpu_custom_call.1}
  #allocation0 [shape = 'u32[]', space=smem, size = 0x4, offset = 0x4, fixed_abs, tag = 'smem constant byte address 0x4 - core index']
  #allocation1 [shape = 'u32[72,128]{1,0:T(1,128)}', space=vmem, size = 0x9000, scoped, tag = 'internal scratch']
  %s0 = inlined_call_operand.vmem [shape: f32[16,32], index: 0, kind: input, shape index: {}]
  %s1 = inlined_call_operand.vmem [shape: f32[256,32], index: 1, kind: input, shape index: {}]
  %s2 = inlined_call_operand.vmem [shape: f32[96,64], index: 2, kind: input, shape index: {}]
  %s3 = inlined_call_operand.vmem [shape: f32[64,16], index: 3, kind: input, shape index: {}]
  %s4 = inlined_call_operand.hbm [shape: f32[16,128], index: 4, kind: output, shape index: {}]
  %s5 = sld [smem:[#allocation0]]
  $region26: #{tpu_custom_call.1} parent=0
    _
  %s7 = ssub.s32 1, %s5
  %s8 = scalar_select 0, %s7, %s5
  $region1: #{tpu_custom_call.1} parent=0
    #allocation2 [shape = 'u8[8192]{0}', space=vmem, size = 0x2000, scoped, tag = 'output window, operand 0, single buffered']
    #allocation3 [shape = 's32[1]{0}', space=sflag, size = 0x4, scoped, tag = 'scoped memory for tpu_custom_call.1']
    %9 = vsyncpa [#allocation3], 0
    // Predicated region
    $region2: #{tpu_custom_call.1} parent=1 // pred_check
      _
    $region3: #{tpu_custom_call.1} parent=1 // pred_check_branch
      %11 = sbr.rel (0) target = $region5
    $region4: #{tpu_custom_call.1} parent=1 // pred_region
      _
    $region5: #{tpu_custom_call.1} parent=1 // pred_fallthru
      _
    // Predicated region
    $region6: #{tpu_custom_call.1} parent=1 // pred_check
      _
    $region7: #{tpu_custom_call.1} parent=1 // pred_check_branch
      %13 = sbr.rel (0) target = $region9
    $region8: #{tpu_custom_call.1} parent=1 // pred_region
      _
    $region9: #{tpu_custom_call.1} parent=1 // pred_fallthru
      _
    // Predicated region
    $region10: #{tpu_custom_call.1} parent=1 // pred_check
      _
    $region11: #{tpu_custom_call.1} parent=1 // pred_check_branch
      %15 = sbr.rel (0) target = $region13
    $region12: #{tpu_custom_call.1} parent=1 // pred_region
      _
    $region13: #{tpu_custom_call.1} parent=1 // pred_fallthru
      _
    // Predicated region
    $region14: #{tpu_custom_call.1} parent=1 // pred_check
      _
    $region15: #{tpu_custom_call.1} parent=1 // pred_check_branch
      %17 = sbr.rel (0) target = $region17
    $region16: #{tpu_custom_call.1} parent=1 // pred_region
      _
    $region17: #{tpu_custom_call.1} parent=1 // pred_fallthru
      _
    %v18 = vld [vmem:[%s0] sm:$0xff]
    %v19 = vld [vmem:[%s0 + $0x8] sm:$0xff]
    %v20 = vld [vmem:[%s1] sm:$0xff]
    %v21 = vld [vmem:[%s1 + $0x8] sm:$0xff]
    %v22 = vld [vmem:[%s1 + $0x10] sm:$0xff]
    %v23 = vld [vmem:[%s1 + $0x18] sm:$0xff]
    %vm24 = vcmask 261120
    %v26 = vsel %vm24, %v18, 0
    %v29 = vsel %vm24, %v19, 0
    %31 = vmatpush.msra.mxu0 0.0
    %32 = vmatpush.msra.mxu0 0.0
    %33 = vmatpush.msra.mxu0 0.0
    %34 = vmatpush.msra.mxu0 0.0
    %35 = vmatpush.msra.mxu0 0.0
    %36 = vmatpush.msra.mxu0 0.0
    %37 = vmatpush.msra.mxu0 0.0
    %38 = vmatpush.msra.mxu0 0.0
    %39 = vmatpush.msra.mxu0 0.0
    %40 = vmatpush.msra.mxu0 0.0
    %41 = vmatpush.msra.mxu0 0.0
    %42 = vmatpush.msra.mxu0 0.0
    %43 = vmatpush.msra.mxu0 %v23
    %44 = vmatpush.msra.mxu0 %v22
    %45 = vmatpush.msra.mxu0 %v21
    %46 = vmatpush.msra.mxu0 %v20
    %47 = vmatmul.f32.gmra.mxu0 %v26
    %v48 = vpop.f32.mrf.mxu0
    %v49 = vadd.f32 0.0, %v48
    %50 = vmatmul.f32.gmra.mxu0 %v29
    %v51 = vpop.f32.mrf.mxu0
    %v52 = vadd.f32 0.0, %v51
    %53 = vdwg.mxu0
    %v54 = vld [vmem:[%s1 + $0x60] sm:$0xff]
    %v55 = vld [vmem:[%s1 + $0x68] sm:$0xff]
    %v56 = vmul.f32 %v18, %v54
    %v57 = vmul.f32 %v19, %v55
    %v58 = vld [vmem:[%s1 + $0x70] sm:$0xff]
    %v59 = vld [vmem:[%s1 + $0x78] sm:$0xff]
    %v60 = vmul.f32 %v49, %v58
    %v61 = vmul.f32 %v52, %v59
    %v62 = vadd.f32 %v56, %v60
    %v63 = vadd.f32 %v57, %v61
    %v64 = vld [vmem:[%s2] sm:$0xff]
    %v65 = vld [vmem:[%s2 + $0x8] sm:$0xff]
    %v66 = vld [vmem:[%s2 + $0x10] sm:$0xff]
    %v67 = vld [vmem:[%s2 + $0x18] sm:$0xff]
    %v68 = vld [vmem:[%s2 + $0x40] sm:$0xff]
    %v69 = vld [vmem:[%s2 + $0x48] sm:$0xff]
    %v71 = vsel %vm24, %v62, 0
    %v74 = vsel %vm24, %v63, 0
    %76 = vmatpush.msra.mxu0 0.0
    %77 = vmatpush.msra.mxu0 0.0
    %78 = vmatpush.msra.mxu0 0.0
    %79 = vmatpush.msra.mxu0 0.0
    %80 = vmatpush.msra.mxu0 0.0
    %81 = vmatpush.msra.mxu0 0.0
    %82 = vmatpush.msra.mxu0 0.0
    %83 = vmatpush.msra.mxu0 0.0
    %84 = vmatpush.msra.mxu0 0.0
    %85 = vmatpush.msra.mxu0 0.0
    %86 = vmatpush.msra.mxu0 0.0
    %87 = vmatpush.msra.mxu0 0.0
    %88 = vmatpush.msra.mxu0 %v67
    %89 = vmatpush.msra.mxu0 %v66
    %90 = vmatpush.msra.mxu0 %v65
    %91 = vmatpush.msra.mxu0 %v64
    %92 = vmatmul.f32.gmra.mxu0 %v71
    %v93 = vpop.f32.mrf.mxu0
    %v94 = vadd.f32 %v68, %v93
    %95 = vmatmul.f32.gmra.mxu0 %v74
    %v96 = vpop.f32.mrf.mxu0
    %v97 = vadd.f32 %v69, %v96
    %98 = vdwg.mxu0
    %v99 = vld [vmem:[%s1 + $0x20] sm:$0xff]
    %v100 = vld [vmem:[%s1 + $0x28] sm:$0xff]
    %v101 = vld [vmem:[%s1 + $0x30] sm:$0xff]
    %v102 = vld [vmem:[%s1 + $0x38] sm:$0xff]
    %v103 = vld [vmem:[%s1 + $0xc0] sm:$0xff]
    %v104 = vld [vmem:[%s1 + $0xc8] sm:$0xff]
    %105 = vmatpush.msra.mxu0 0.0
    %106 = vmatpush.msra.mxu0 0.0
    %107 = vmatpush.msra.mxu0 0.0
    %108 = vmatpush.msra.mxu0 0.0
    %109 = vmatpush.msra.mxu0 0.0
    %110 = vmatpush.msra.mxu0 0.0
    %111 = vmatpush.msra.mxu0 0.0
    %112 = vmatpush.msra.mxu0 0.0
    %113 = vmatpush.msra.mxu0 0.0
    %114 = vmatpush.msra.mxu0 0.0
    %115 = vmatpush.msra.mxu0 0.0
    %116 = vmatpush.msra.mxu0 0.0
    %117 = vmatpush.msra.mxu0 %v102
    %118 = vmatpush.msra.mxu0 %v101
    %119 = vmatpush.msra.mxu0 %v100
    %120 = vmatpush.msra.mxu0 %v99
    %121 = vmatmul.f32.gmra.mxu0 %v26
    %v122 = vpop.f32.mrf.mxu0
    %v123 = vadd.f32 %v103, %v122
    %124 = vmatmul.f32.gmra.mxu0 %v29
    %v125 = vpop.f32.mrf.mxu0
    %v126 = vadd.f32 %v104, %v125
    %127 = vdwg.mxu0
    %v128 = vld [vmem:[%s1 + $0x80] sm:$0xff]
    %v129 = vld [vmem:[%s1 + $0x88] sm:$0xff]
    %v130 = vld [vmem:[%s1 + $0x90] sm:$0xff]
    %v131 = vld [vmem:[%s1 + $0x98] sm:$0xff]
    %v132 = vld [vmem:[%s1 + $0xa0] sm:$0xff]
    %v133 = vld [vmem:[%s1 + $0xa8] sm:$0xff]
    %v134 = vld [vmem:[%s1 + $0xb0] sm:$0xff]
    %v135 = vld [vmem:[%s1 + $0xb8] sm:$0xff]
    %v136 = vmul.f32 %v94, %v128
    %v137 = vmul.f32 %v97, %v129
    %v138 = vmul.f32 %v94, %v130
    %v139 = vmul.f32 %v97, %v131
    %v140 = vmul.f32 %v94, %v132
    %v141 = vmul.f32 %v97, %v133
    %v142 = vmul.f32 %v94, %v134
    %v143 = vmul.f32 %v97, %v135
    %v144 = vld [vmem:[%s3] sm:$0xff]
    %v145 = vld [vmem:[%s3 + $0x8] sm:$0xff]
    %v146 = vld [vmem:[%s3 + $0x10] sm:$0xff]
    %v147 = vld [vmem:[%s3 + $0x18] sm:$0xff]
    %v148 = vld [vmem:[%s3 + $0x20] sm:$0xff]
    %v149 = vld [vmem:[%s3 + $0x28] sm:$0xff]
    %v150 = vld [vmem:[%s3 + $0x30] sm:$0xff]
    %v151 = vld [vmem:[%s3 + $0x38] sm:$0xff]
    %154 = vrot.lane.b32.xlu0 %v94, 96
    %v155 = vpop.permute.xlu0 %154
    %156 = vrot.lane.b32.xlu0 %v97, 96
    %v157 = vpop.permute.xlu0 %156
    %v159 = vsel %vm24, %v136, 0
    %v162 = vsel %vm24, %v137, 0
    %v165 = vsel %vm24, %v138, 0
    %v168 = vsel %vm24, %v139, 0
    %v171 = vsel %vm24, %v140, 0
    %v174 = vsel %vm24, %v141, 0
    %v177 = vsel %vm24, %v142, 0
    %v180 = vsel %vm24, %v143, 0
    %v182 = vsel %vm24, %v155, 0
    %v184 = vsel %vm24, %v157, 0
    %186 = vmatpush.xpose.msra.mxu0 0.0
    %187 = vmatpush.xpose.msra.mxu0 0.0
    %188 = vmatpush.xpose.msra.mxu0 0.0
    %189 = vmatpush.xpose.msra.mxu0 0.0
    %190 = vmatpush.xpose.msra.mxu0 0.0
    %191 = vmatpush.xpose.msra.mxu0 0.0
    %192 = vmatpush.xpose.msra.mxu0 0.0
    %193 = vmatpush.xpose.msra.mxu0 0.0
    %194 = vmatpush.xpose.msra.mxu0 0.0
    %195 = vmatpush.xpose.msra.mxu0 0.0
    %196 = vmatpush.xpose.msra.mxu0 0.0
    %197 = vmatpush.xpose.msra.mxu0 0.0
    %198 = vmatpush.xpose.msra.mxu0 0.0
    %199 = vmatpush.xpose.msra.mxu0 0.0
    %200 = vmatpush.xpose.msra.mxu0 %v184
    %201 = vmatpush.xpose.msra.mxu0 %v182
    %202 = vmatmul.f32.gmra.mxu0 %v159
    %v203 = vpop.f32.mrf.mxu0
    %v204 = vadd.f32 %v144, %v203
    %205 = vmatmul.f32.gmra.mxu0 %v162
    %v206 = vpop.f32.mrf.mxu0
    %v207 = vadd.f32 %v145, %v206
    %208 = vmatmul.f32.gmra.mxu0 %v165
    %v209 = vpop.f32.mrf.mxu0
    %v210 = vadd.f32 %v146, %v209
    %211 = vmatmul.f32.gmra.mxu0 %v168
    %v212 = vpop.f32.mrf.mxu0
    %v213 = vadd.f32 %v147, %v212
    %214 = vmatmul.f32.gmra.mxu0 %v171
    %v215 = vpop.f32.mrf.mxu0
    %v216 = vadd.f32 %v148, %v215
    %217 = vmatmul.f32.gmra.mxu0 %v174
    %v218 = vpop.f32.mrf.mxu0
    %v219 = vadd.f32 %v149, %v218
    %220 = vmatmul.f32.gmra.mxu0 %v177
    %v221 = vpop.f32.mrf.mxu0
    %v222 = vadd.f32 %v150, %v221
    %223 = vmatmul.f32.gmra.mxu0 %v180
    %v224 = vpop.f32.mrf.mxu0
    %v225 = vadd.f32 %v151, %v224
    %226 = vdwg.mxu0
    %vm227 = vcmask 130048
    %v228 = vsel %vm227, %v204, -inf
    %229 = vmax.xlane.f32.xlu0 %v228
    %v230 = vpop.xlane.xlu0 %229
    %v231 = vsel %vm227, %v207, -inf
    %232 = vmax.xlane.f32.xlu0 %v231
    %v233 = vpop.xlane.xlu0 %232
    %v234 = vsel %vm227, %v210, -inf
    %235 = vmax.xlane.f32.xlu0 %v234
    %v236 = vpop.xlane.xlu0 %235
    %v237 = vsel %vm227, %v213, -inf
    %238 = vmax.xlane.f32.xlu0 %v237
    %v239 = vpop.xlane.xlu0 %238
    %v240 = vsel %vm227, %v216, -inf
    %241 = vmax.xlane.f32.xlu0 %v240
    %v242 = vpop.xlane.xlu0 %241
    %v243 = vsel %vm227, %v219, -inf
    %244 = vmax.xlane.f32.xlu0 %v243
    %v245 = vpop.xlane.xlu0 %244
    %v246 = vsel %vm227, %v222, -inf
    %247 = vmax.xlane.f32.xlu0 %v246
    %v248 = vpop.xlane.xlu0 %247
    %v249 = vsel %vm227, %v225, -inf
    %250 = vmax.xlane.f32.xlu0 %v249
    %v251 = vpop.xlane.xlu0 %250
    %v252 = vsub.f32 %v204, %v230
    %v253 = vsub.f32 %v207, %v233
    %v254 = vsub.f32 %v210, %v236
    %v255 = vsub.f32 %v213, %v239
    %v256 = vsub.f32 %v216, %v242
    %v257 = vsub.f32 %v219, %v245
    %v258 = vsub.f32 %v222, %v248
    %v259 = vsub.f32 %v225, %v251
    %v260 = vmul.f32 %v252, 1.442695
    %v261 = vpow.pop %v260
    %v262 = vmul.f32 %v253, 1.442695
    %v263 = vpow.pop %v262
    %v264 = vmul.f32 %v254, 1.442695
    %v265 = vpow.pop %v264
    %v266 = vmul.f32 %v255, 1.442695
    %v267 = vpow.pop %v266
    %v268 = vmul.f32 %v256, 1.442695
    %v269 = vpow.pop %v268
    %v270 = vmul.f32 %v257, 1.442695
    %v271 = vpow.pop %v270
    %v272 = vmul.f32 %v258, 1.442695
    %v273 = vpow.pop %v272
    %v274 = vmul.f32 %v259, 1.442695
    %v275 = vpow.pop %v274
    %v276 = vsel %vm227, %v261, 0.0
    %277 = vadd.xlane.f32.xlu0 %v276
    %v278 = vpop.xlane.xlu0 %277
    %v279 = vsel %vm227, %v263, 0.0
    %280 = vadd.xlane.f32.xlu0 %v279
    %v281 = vpop.xlane.xlu0 %280
    %v282 = vsel %vm227, %v265, 0.0
    %283 = vadd.xlane.f32.xlu0 %v282
    %v284 = vpop.xlane.xlu0 %283
    %v285 = vsel %vm227, %v267, 0.0
    %286 = vadd.xlane.f32.xlu0 %v285
    %v287 = vpop.xlane.xlu0 %286
    %v288 = vsel %vm227, %v269, 0.0
    %289 = vadd.xlane.f32.xlu0 %v288
    %v290 = vpop.xlane.xlu0 %289
    %v291 = vsel %vm227, %v271, 0.0
    %292 = vadd.xlane.f32.xlu0 %v291
    %v293 = vpop.xlane.xlu0 %292
    %v294 = vsel %vm227, %v273, 0.0
    %295 = vadd.xlane.f32.xlu0 %v294
    %v296 = vpop.xlane.xlu0 %295
    %v297 = vsel %vm227, %v275, 0.0
    %298 = vadd.xlane.f32.xlu0 %v297
    %v299 = vpop.xlane.xlu0 %298
    %v300 = vrcp.pop %v278
    %v301 = vrcp.pop %v281
    %v302 = vrcp.pop %v284
    %v303 = vrcp.pop %v287
    %v304 = vrcp.pop %v290
    %v305 = vrcp.pop %v293
    %v306 = vrcp.pop %v296
    %v307 = vrcp.pop %v299
    %v308 = vmul.f32 %v261, %v300
    %v309 = vmul.f32 %v263, %v301
    %v310 = vmul.f32 %v265, %v302
    %v311 = vmul.f32 %v267, %v303
    %v312 = vmul.f32 %v269, %v304
    %v313 = vmul.f32 %v271, %v305
    %v314 = vmul.f32 %v273, %v306
    %v315 = vmul.f32 %v275, %v307
    %v317 = vsel %vm227, %v308, 0
    %v320 = vsel %vm227, %v309, 0
    %v323 = vsel %vm227, %v310, 0
    %v326 = vsel %vm227, %v311, 0
    %v329 = vsel %vm227, %v312, 0
    %v332 = vsel %vm227, %v313, 0
    %v335 = vsel %vm227, %v314, 0
    %v338 = vsel %vm227, %v315, 0
    %340 = vmatpush.msra.mxu0 0.0
    %341 = vmatpush.msra.mxu0 0.0
    %342 = vmatpush.msra.mxu0 0.0
    %343 = vmatpush.msra.mxu0 0.0
    %344 = vmatpush.msra.mxu0 0.0
    %345 = vmatpush.msra.mxu0 0.0
    %346 = vmatpush.msra.mxu0 0.0
    %347 = vmatpush.msra.mxu0 0.0
    %348 = vmatpush.msra.mxu0 0.0
    %349 = vmatpush.msra.mxu0 0.0
    %350 = vmatpush.msra.mxu0 0.0
    %351 = vmatpush.msra.mxu0 0.0
    %352 = vmatpush.msra.mxu0 0.0
    %353 = vmatpush.msra.mxu0 0.0
    %354 = vmatpush.msra.mxu0 %v126
    %355 = vmatpush.msra.mxu0 %v123
    %356 = vmatmul.f32.gmra.mxu0 %v317
    %v357 = vpop.f32.mrf.mxu0
    %v358 = vadd.f32 0.0, %v357
    %359 = vmatmul.f32.gmra.mxu0 %v320
    %v360 = vpop.f32.mrf.mxu0
    %v361 = vadd.f32 0.0, %v360
    %362 = vmatmul.f32.gmra.mxu0 %v323
    %v363 = vpop.f32.mrf.mxu0
    %v364 = vadd.f32 0.0, %v363
    %365 = vmatmul.f32.gmra.mxu0 %v326
    %v366 = vpop.f32.mrf.mxu0
    %v367 = vadd.f32 0.0, %v366
    %368 = vmatmul.f32.gmra.mxu0 %v329
    %v369 = vpop.f32.mrf.mxu0
    %v370 = vadd.f32 0.0, %v369
    %371 = vmatmul.f32.gmra.mxu0 %v332
    %v372 = vpop.f32.mrf.mxu0
    %v373 = vadd.f32 0.0, %v372
    %374 = vmatmul.f32.gmra.mxu0 %v335
    %v375 = vpop.f32.mrf.mxu0
    %v376 = vadd.f32 0.0, %v375
    %377 = vmatmul.f32.gmra.mxu0 %v338
    %v378 = vpop.f32.mrf.mxu0
    %v379 = vadd.f32 0.0, %v378
    %380 = vdwg.mxu0
    %v381 = vmul.f32 %v358, %v128
    %v382 = vmul.f32 %v361, %v129
    %v383 = vmul.f32 %v364, %v130
    %v384 = vmul.f32 %v367, %v131
    %v385 = vmul.f32 %v370, %v132
    %v386 = vmul.f32 %v373, %v133
    %v387 = vmul.f32 %v376, %v134
    %v388 = vmul.f32 %v379, %v135
    %v389 = vadd.f32 %v381, %v383
    %v390 = vadd.f32 %v382, %v384
    %v391 = vadd.f32 %v389, %v385
    %v392 = vadd.f32 %v390, %v386
    %v393 = vadd.f32 %v391, %v387
    %v394 = vadd.f32 %v392, %v388
    %v395 = vld [vmem:[%s1 + $0x40] sm:$0xff]
    %v396 = vld [vmem:[%s1 + $0x48] sm:$0xff]
    %v397 = vld [vmem:[%s1 + $0x50] sm:$0xff]
    %v398 = vld [vmem:[%s1 + $0x58] sm:$0xff]
    %v399 = vld [vmem:[%s1 + $0xd0] sm:$0xff]
    %v400 = vld [vmem:[%s1 + $0xd8] sm:$0xff]
    %v402 = vsel %vm24, %v393, 0
    %v405 = vsel %vm24, %v394, 0
    %407 = vmatpush.msra.mxu0 0.0
    %408 = vmatpush.msra.mxu0 0.0
    %409 = vmatpush.msra.mxu0 0.0
    %410 = vmatpush.msra.mxu0 0.0
    %411 = vmatpush.msra.mxu0 0.0
    %412 = vmatpush.msra.mxu0 0.0
    %413 = vmatpush.msra.mxu0 0.0
    %414 = vmatpush.msra.mxu0 0.0
    %415 = vmatpush.msra.mxu0 0.0
    %416 = vmatpush.msra.mxu0 0.0
    %417 = vmatpush.msra.mxu0 0.0
    %418 = vmatpush.msra.mxu0 0.0
    %419 = vmatpush.msra.mxu0 %v398
    %420 = vmatpush.msra.mxu0 %v397
    %421 = vmatpush.msra.mxu0 %v396
    %422 = vmatpush.msra.mxu0 %v395
    %423 = vmatmul.f32.gmra.mxu0 %v402
    %v424 = vpop.f32.mrf.mxu0
    %v425 = vadd.f32 %v399, %v424
    %426 = vmatmul.f32.gmra.mxu0 %v405
    %v427 = vpop.f32.mrf.mxu0
    %v428 = vadd.f32 %v400, %v427
    %429 = vdwg.mxu0
    %v430 = vadd.f32 %v18, %v425
    %v431 = vadd.f32 %v19, %v428
    %v432 = vmul.f32 %v430, %v430
    %v433 = vmul.f32 %v431, %v431
    %v434 = vsel %vm24, %v432, 0.0
    %435 = vadd.xlane.f32.xlu0 %v434
    %v436 = vpop.xlane.xlu0 %435
    %v437 = vsel %vm24, %v433, 0.0
    %438 = vadd.xlane.f32.xlu0 %v437
    %v439 = vpop.xlane.xlu0 %438
    %v440 = vrcp.pop 32.0
    %v441 = vmul.f32 32.0, %v440
    %v442 = vsub.f32 1.0, %v441
    %v443 = vmul.f32 %v440, %v442
    %v444 = vadd.f32 %v440, %v443
    %vm445 = vweird.f32 %v440
    %v446 = vsel %vm445, %v440, %v444
    %v447 = vmul.f32 %v436, %v446
    %v448 = vmul.f32 %v439, %v446
    %v449 = vadd.f32 %v447, 1e-06
    %v450 = vadd.f32 %v448, 1e-06
    %v451 = vrsqrt.pop %v449
    %v452 = vmul.f32 %v451, %v449
    %v453 = vmul.f32 %v452, %v451
    %v454 = vmul.f32 0.5, %v453
    %v455 = vsub.f32 1.5, %v454
    %v456 = vmul.f32 %v451, %v455
    %vm457 = vweird.f32 %v449
    %vm458 = vweird.f32 %v451
    %vm459 = vmor %vm457, %vm458
    %v460 = vsel %vm459, %v451, %v456
    %v461 = vrsqrt.pop %v450
    %v462 = vmul.f32 %v461, %v450
    %v463 = vmul.f32 %v462, %v461
    %v464 = vmul.f32 0.5, %v463
    %v465 = vsub.f32 1.5, %v464
    %v466 = vmul.f32 %v461, %v465
    %vm467 = vweird.f32 %v450
    %vm468 = vweird.f32 %v461
    %vm469 = vmor %vm467, %vm468
    %v470 = vsel %vm469, %v461, %v466
    %v471 = vmul.f32 %v430, %v460
    %v472 = vmul.f32 %v431, %v470
    %v473 = vld [vmem:[%s1 + $0xe0] sm:$0xff]
    %v474 = vld [vmem:[%s1 + $0xe8] sm:$0xff]
    %v475 = vmul.f32 %v471, %v473
    %v476 = vmul.f32 %v472, %v474
    %v477 = vld [vmem:[%s2 + $0x20] sm:$0xff]
    %v478 = vld [vmem:[%s2 + $0x28] sm:$0xff]
    %v479 = vld [vmem:[%s2 + $0x30] sm:$0xff]
    %v480 = vld [vmem:[%s2 + $0x38] sm:$0xff]
    %v481 = vld [vmem:[%s2 + $0x50] sm:$0xff]
    %v482 = vld [vmem:[%s2 + $0x58] sm:$0xff]
    %v484 = vsel %vm24, %v475, 0
    %v487 = vsel %vm24, %v476, 0
    %489 = vmatpush.msra.mxu0 0.0
    %490 = vmatpush.msra.mxu0 0.0
    %491 = vmatpush.msra.mxu0 0.0
    %492 = vmatpush.msra.mxu0 0.0
    %493 = vmatpush.msra.mxu0 0.0
    %494 = vmatpush.msra.mxu0 0.0
    %495 = vmatpush.msra.mxu0 0.0
    %496 = vmatpush.msra.mxu0 0.0
    %497 = vmatpush.msra.mxu0 0.0
    %498 = vmatpush.msra.mxu0 0.0
    %499 = vmatpush.msra.mxu0 0.0
    %500 = vmatpush.msra.mxu0 0.0
    %501 = vmatpush.msra.mxu0 %v480
    %502 = vmatpush.msra.mxu0 %v479
    %503 = vmatpush.msra.mxu0 %v478
    %504 = vmatpush.msra.mxu0 %v477
    %505 = vmatmul.f32.gmra.mxu0 %v484
    %v506 = vpop.f32.mrf.mxu0
    %v507 = vadd.f32 %v481, %v506
    %508 = vmatmul.f32.gmra.mxu0 %v487
    %v509 = vpop.f32.mrf.mxu0
    %v510 = vadd.f32 %v482, %v509
    %511 = vdwg.mxu0
    %v512 = vmul.f32 %v507, %v507
    %v513 = vmul.f32 %v510, %v510
    %v514 = vmul.f32 %v507, %v512
    %v515 = vmul.f32 %v510, %v513
    %v516 = vmul.f32 %v514, 0.044715
    %v517 = vmul.f32 %v515, 0.044715
    %v518 = vadd.f32 %v507, %v516
    %v519 = vadd.f32 %v510, %v517
    %v520 = vmul.f32 %v518, 0.7978846
    %v521 = vmul.f32 %v519, 0.7978846
    %v522 = vtanh.pop %v520
    %v523 = vtanh.pop %v521
    %v524 = vadd.f32 %v522, 1.0
    %v525 = vadd.f32 %v523, 1.0
    %v526 = vmul.f32 %v524, 0.5
    %v527 = vmul.f32 %v525, 0.5
    %v528 = vmul.f32 %v507, %v526
    %v529 = vmul.f32 %v510, %v527
    %532 = vrot.lane.b32.xlu0 %v528, 96
    %v533 = vpop.permute.xlu0 %532
    %534 = vrot.lane.b32.xlu0 %v529, 96
    %v535 = vpop.permute.xlu0 %534
    %v538 = vmul.f32 %v507, %v533
    %v539 = vmul.f32 %v510, %v535
    %v540 = vadd.f32 %v475, %v538
    %v541 = vadd.f32 %v476, %v539
    %v542 = vmul.f32 %v540, %v540
    %v543 = vmul.f32 %v541, %v541
    %v544 = vsel %vm24, %v542, 0.0
    %545 = vadd.xlane.f32.xlu0 %v544
    %v546 = vpop.xlane.xlu0 %545
    %v547 = vsel %vm24, %v543, 0.0
    %548 = vadd.xlane.f32.xlu0 %v547
    %v549 = vpop.xlane.xlu0 %548
    %v550 = vmul.f32 %v546, %v446
    %v551 = vmul.f32 %v549, %v446
    %v552 = vadd.f32 %v550, 1e-06
    %v553 = vadd.f32 %v551, 1e-06
    %v554 = vrsqrt.pop %v552
    %v555 = vmul.f32 %v554, %v552
    %v556 = vmul.f32 %v555, %v554
    %v557 = vmul.f32 0.5, %v556
    %v558 = vsub.f32 1.5, %v557
    %v559 = vmul.f32 %v554, %v558
    %vm560 = vweird.f32 %v552
    %vm561 = vweird.f32 %v554
    %vm562 = vmor %vm560, %vm561
    %v563 = vsel %vm562, %v554, %v559
    %v564 = vrsqrt.pop %v553
    %v565 = vmul.f32 %v564, %v553
    %v566 = vmul.f32 %v565, %v564
    %v567 = vmul.f32 0.5, %v566
    %v568 = vsub.f32 1.5, %v567
    %v569 = vmul.f32 %v564, %v568
    %vm570 = vweird.f32 %v553
    %vm571 = vweird.f32 %v564
    %vm572 = vmor %vm570, %vm571
    %v573 = vsel %vm572, %v564, %v569
    %v574 = vmul.f32 %v540, %v563
    %v575 = vmul.f32 %v541, %v573
    %v576 = vld [vmem:[%s1 + $0xf0] sm:$0xff]
    %v577 = vld [vmem:[%s1 + $0xf8] sm:$0xff]
    %v578 = vmul.f32 %v574, %v576
    %v579 = vmul.f32 %v575, %v577
    %580 = vrot.lane.b32.xlu0 %v62, 32
    %v581 = vpop.permute.xlu0 %580
    %582 = vrot.lane.b32.xlu0 %v63, 32
    %v583 = vpop.permute.xlu0 %582
    %v586 = vsel %vm24, %v578, %v581
    %v587 = vsel %vm24, %v579, %v583
    %vm588 = vcmask 523264
    %v589 = vsel %vm588, %v586, 0.0
    %v590 = vsel %vm588, %v587, 0.0
    %591 = vst [vmem:[#allocation2] sm:$0xff] %v589
    %592 = vst [vmem:[#allocation2 + $0x8] sm:$0xff] %v590
    // Predicated region
    $region18: #{tpu_custom_call.1} parent=1 // pred_check
      _
    $region19: #{tpu_custom_call.1} parent=1 // pred_check_branch
      %594 = sbr.rel (0) target = $region21
    $region20: #{tpu_custom_call.1} parent=1 // pred_region
      %596 = vsyncadd [#allocation3], 0
      %s597 = sshll.u32 [#allocation2], 4
      %s598 = int_to_ptr.vmem [resolvable:$true] %s597
      %s599 = sshll.u32 %s4, 4
      %s600 = int_to_ptr.hbm [resolvable:$true] %s599
      %605 = dma.vmem_to_hbm [thread:$0]  %s598, 256, %s600, [#allocation3], 128, 128, 8
    $region21: #{tpu_custom_call.1} parent=1 // pred_fallthru
      _
    // Predicated region
    $region22: #{tpu_custom_call.1} parent=1 // pred_check
      _
    $region23: #{tpu_custom_call.1} parent=1 // pred_check_branch
      %607 = sbr.rel (0) target = $region25
    $region24: #{tpu_custom_call.1} parent=1 // pred_region
      %609 = dma.done [#allocation3], 256
    $region25: #{tpu_custom_call.1} parent=1 // pred_fallthru
      _
    %610 = vsyncpa [#allocation3], 1

</llo_original>
